<compile_context>
chip_gen: v7x
topology: tpu7x:2x2x1
jax: 0.10.0
libtpu: 0.0.40
codegen_flags: <defaults>
</compile_context>

<pallas_src>
import functools

import jax
import jax.numpy as jnp
from jax.experimental import pallas as pl
from jax.experimental.pallas import tpu as pltpu


LANE = 128  # TPU vreg lane width


def _policy_kernel(ids_ref, w1_ref, b1_ref, w2_ref, b2_ref, o_ref):
    """One batch tile: one-hot fc1 (MXU), relu, fc2 (MXU), stable softmax."""
    tb = o_ref.shape[0]              # static tile rows
    in_pad = w1_ref.shape[0]         # padded input dim (multiple of 128)

    # fc1: build the one-hot encoding in vregs and run it through the MXU.
    # A state index outside [0, in_pad) simply yields an all-zero row, so there
    # is no out-of-bounds access (unlike the previous scalar row-gather).
    ids = ids_ref[...]                                            # (tb, 1) int32
    cols = jax.lax.broadcasted_iota(jnp.int32, (tb, in_pad), 1)   # (tb, in_pad)
    one_hot = (cols == ids).astype(w1_ref.dtype)                  # exact 0/1 bf16

    h = jnp.dot(one_hot, w1_ref[...], preferred_element_type=jnp.float32)
    h = jnp.maximum(h + b1_ref[...], 0.0)                         # f32 bias + relu

    # fc2: bf16 MXU, f32 accumulate. Padded output columns carry bias -inf so
    # their exp() is exactly 0 and they drop out of the softmax.
    logits = jnp.dot(h.astype(w2_ref.dtype), w2_ref[...],
                     preferred_element_type=jnp.float32) + b2_ref[...]

    # Numerically stable softmax over the lane-dense last dim (f32).
    m = jnp.max(logits, axis=-1, keepdims=True)
    e = jnp.exp(logits - m)
    denom = jnp.sum(e, axis=-1, keepdims=True)
    # approx=False: exact normalization (REINFORCE consumes log pi(a|s)).
    o_ref[...] = (e * pl.reciprocal(denom, approx=False)).astype(o_ref.dtype)


@functools.partial(jax.jit, static_argnames=("tile_b",))
def policy_network_forward(states, w1, b1, w2, b2, tile_b=256):
    """Forward pass of PolicyNetwork for one-hot-encoded states.

    states: (B,) int32 state indices (argmax of the one-hot input x).
    w1: (input_dim, 128), b1: (128,), w2: (128, output_dim), b2: (output_dim,)
    (weights stored as (in, out), i.e. PyTorch's W.T).
    Returns softmax probabilities of shape (B, output_dim), float32.
    """
    B = states.shape[0]
    input_dim, hidden = w1.shape
    output_dim = w2.shape[1]

    # Batch tile: large enough to amortize grid-step overhead and fill MXU rows,
    # but never larger than the (8-rounded) batch itself. Multi-tile grids are
    # marked "parallel" so they shard across TensorCores on v7x.
    tb = min(tile_b, max(8, ((B + 7) // 8) * 8))
    tb = ((tb + 7) // 8) * 8
    b_pad = ((B + tb - 1) // tb) * tb

    # State indices as a regular (b_pad, 1) int32 VMEM input (no scalar prefetch).
    ids = jnp.zeros((b_pad, 1), jnp.int32).at[:B, 0].set(states.astype(jnp.int32))

    # Pad fc1's input dim and fc2's output dim to full 128-lane vregs.
    in_pad = ((input_dim + LANE - 1) // LANE) * LANE
    out_pad = ((output_dim + LANE - 1) // LANE) * LANE

    # bf16 weights -> MXU fast path; biases stay f32.
    w1_p = (jnp.zeros((in_pad, hidden), jnp.float32)
            .at[:input_dim, :].set(w1)).astype(jnp.bfloat16)
    w2_p = (jnp.zeros((hidden, out_pad), jnp.float32)
            .at[:, :output_dim].set(w2)).astype(jnp.bfloat16)
    b1_2d = b1.reshape(1, hidden).astype(jnp.float32)
    b2_p = jnp.full((1, out_pad), -jnp.inf, jnp.float32).at[0, :output_dim].set(b2)

    grid = (b_pad // tb,)

    probs_padded = pl.pallas_call(
        _policy_kernel,
        out_shape=jax.ShapeDtypeStruct((b_pad, out_pad), jnp.float32),
        grid_spec=pltpu.PrefetchScalarGridSpec(
            num_scalar_prefetch=0,
            grid=grid,
            in_specs=[
                pl.BlockSpec((tb, 1), lambda i: (i, 0)),              # state ids
                pl.BlockSpec((in_pad, hidden), lambda i: (0, 0)),     # W1 (bf16, padded)
                pl.BlockSpec((1, hidden), lambda i: (0, 0)),          # b1 (f32)
                pl.BlockSpec((hidden, out_pad), lambda i: (0, 0)),    # W2 (bf16, padded)
                pl.BlockSpec((1, out_pad), lambda i: (0, 0)),         # b2 (f32, -inf pads)
            ],
            out_specs=pl.BlockSpec((tb, out_pad), lambda i: (i, 0)),
        ),
        compiler_params=pltpu.CompilerParams(
            dimension_semantics=("parallel",),   # batch tiles are independent
        ),
    )(ids, w1_p, b1_2d, w2_p, b2_p)

    return probs_padded[:B, :output_dim]


def init_params(key, input_dim, output_dim, hidden=128):
    """Deterministic init mimicking nn.Linear default (uniform +-1/sqrt(fan_in))."""
    k1, k2, k3, k4 = jax.random.split(key, 4)
    bound1 = 1.0 / jnp.sqrt(jnp.float32(input_dim))
    bound2 = 1.0 / jnp.sqrt(jnp.float32(hidden))
    # Stored as (in, out) == W.T relative to PyTorch's (out, in).
    w1 = jax.random.uniform(k1, (input_dim, hidden), jnp.float32, -bound1, bound1)
    b1 = jax.random.uniform(k2, (hidden,), jnp.float32, -bound1, bound1)
    w2 = jax.random.uniform(k3, (hidden, output_dim), jnp.float32, -bound2, bound2)
    b2 = jax.random.uniform(k4, (output_dim,), jnp.float32, -bound2, bound2)
    return w1, b1, w2, b2


def _reference(states, w1, b1, w2, b2, input_dim):
    x = jax.nn.one_hot(states, input_dim, dtype=jnp.float32)
    h = jnp.maximum(x @ w1 + b1, 0.0)
    return jax.nn.softmax(h @ w2 + b2, axis=-1)


if __name__ == "__main__":
    # CliffWalking-style setup implied by state_one_hot: input_dim = 48 one-hot
    # states, output_dim = 4 actions.
    input_dim, output_dim = 48, 4

    key = jax.random.PRNGKey(0)
    k_params, k_states, k_big = jax.random.split(key, 3)
    w1, b1, w2, b2 = init_params(k_params, input_dim, output_dim)

    # --- small batch (single tile) ---
    batch = 8
    states = jax.random.randint(k_states, (batch,), 0, input_dim)
    probs = policy_network_forward(states, w1, b1, w2, b2)
    jax.block_until_ready(probs)

    probs_ref = _reference(states, w1, b1, w2, b2, input_dim)
    assert probs.shape == (batch, output_dim)
    # bf16 matmul operands (f32 accumulate) -> slightly loosened tolerances.
    assert jnp.allclose(probs, probs_ref, atol=2e-3, rtol=2e-3)
    assert jnp.allclose(jnp.sum(probs, axis=-1), 1.0, atol=1e-3)

    # --- larger batch (multi-tile grid, exercises padding + parallel axis) ---
    big_batch = 600
    states_big = jax.random.randint(k_big, (big_batch,), 0, input_dim)
    probs_big = policy_network_forward(states_big, w1, b1, w2, b2)
    jax.block_until_ready(probs_big)

    probs_big_ref = _reference(states_big, w1, b1, w2, b2, input_dim)
    assert probs_big.shape == (big_batch, output_dim)
    assert jnp.allclose(probs_big, probs_big_ref, atol=2e-3, rtol=2e-3)
    assert jnp.allclose(jnp.sum(probs_big, axis=-1), 1.0, atol=1e-3)

    print("KERNEL_OK")
</pallas_src>

<mosaic_0001>
module attributes {stable_mosaic.version = 11 : i64} {
  func.func @_policy_kernel(%arg0: i32, %arg1: memref<8x1xi32, #tpu.memory_space<vmem>>, %arg2: memref<128x128xbf16, #tpu.memory_space<vmem>>, %arg3: memref<1x128xf32, #tpu.memory_space<vmem>>, %arg4: memref<128x128xbf16, #tpu.memory_space<vmem>>, %arg5: memref<1x128xf32, #tpu.memory_space<vmem>>, %arg6: memref<8x128xf32, #tpu.memory_space<vmem>>) attributes {dimension_semantics = [#tpu.dimension_semantics<parallel>], iteration_bounds = array<i64: 1>, scalar_prefetch = 0 : i64, scratch_operands = 0 : i64, tpu.core_type = #tpu.core_type<tc>, window_params = [{transform_indices = @transform_0, window_bounds = array<i64: 8, 1>}, {pipeline_mode = #tpu.pipeline_mode<synchronous>, transform_indices = @transform_1, window_bounds = array<i64: 128, 128>}, {pipeline_mode = #tpu.pipeline_mode<synchronous>, transform_indices = @transform_2, window_bounds = array<i64: 1, 128>}, {pipeline_mode = #tpu.pipeline_mode<synchronous>, transform_indices = @transform_3, window_bounds = array<i64: 128, 128>}, {pipeline_mode = #tpu.pipeline_mode<synchronous>, transform_indices = @transform_4, window_bounds = array<i64: 1, 128>}, {transform_indices = @transform_5, window_bounds = array<i64: 8, 128>}]} {
    %c0 = arith.constant 0 : index
    %c0_0 = arith.constant 0 : index
    %0 = vector.load %arg1[%c0, %c0_0] : memref<8x1xi32, #tpu.memory_space<vmem>>, vector<8x1xi32>
    %1 = tpu.iota {dimensions = array<i32: 1>} : vector<8x128xi32>
    %2 = vector.broadcast %0 : vector<8x1xi32> to vector<8x128xi32>
    %3 = arith.cmpi eq, %1, %2 : vector<8x128xi32>
    %4 = arith.extui %3 : vector<8x128xi1> to vector<8x128xi32>
    %5 = arith.sitofp %4 : vector<8x128xi32> to vector<8x128xf32>
    %6 = arith.truncf %5 : vector<8x128xf32> to vector<8x128xbf16>
    %c0_1 = arith.constant 0 : index
    %c0_2 = arith.constant 0 : index
    %7 = vector.load %arg2[%c0_1, %c0_2] : memref<128x128xbf16, #tpu.memory_space<vmem>>, vector<128x128xbf16>
    %cst = arith.constant dense<0.000000e+00> : vector<8x128xf32>
    %8 = tpu.matmul %6, %7, %cst {dimension_numbers = #tpu.dot_dimension_numbers<[1], [0], [0], [1], [0, 0, 1, 1], [], []>} : vector<8x128xbf16>, vector<128x128xbf16>, vector<8x128xf32> -> vector<8x128xf32>
    %c0_3 = arith.constant 0 : index
    %c0_4 = arith.constant 0 : index
    %9 = vector.load %arg3[%c0_3, %c0_4] : memref<1x128xf32, #tpu.memory_space<vmem>>, vector<1x128xf32>
    %10 = vector.broadcast %9 : vector<1x128xf32> to vector<8x128xf32>
    %11 = arith.addf %8, %10 : vector<8x128xf32>
    %cst_5 = arith.constant 0.000000e+00 : f32
    %12 = vector.broadcast %cst_5 : f32 to vector<8x128xf32>
    %13 = arith.maximumf %11, %12 : vector<8x128xf32>
    %14 = arith.truncf %13 : vector<8x128xf32> to vector<8x128xbf16>
    %c0_6 = arith.constant 0 : index
    %c0_7 = arith.constant 0 : index
    %15 = vector.load %arg4[%c0_6, %c0_7] : memref<128x128xbf16, #tpu.memory_space<vmem>>, vector<128x128xbf16>
    %cst_8 = arith.constant dense<0.000000e+00> : vector<8x128xf32>
    %16 = tpu.matmul %14, %15, %cst_8 {dimension_numbers = #tpu.dot_dimension_numbers<[1], [0], [0], [1], [0, 0, 1, 1], [], []>} : vector<8x128xbf16>, vector<128x128xbf16>, vector<8x128xf32> -> vector<8x128xf32>
    %c0_9 = arith.constant 0 : index
    %c0_10 = arith.constant 0 : index
    %17 = vector.load %arg5[%c0_9, %c0_10] : memref<1x128xf32, #tpu.memory_space<vmem>>, vector<1x128xf32>
    %18 = vector.broadcast %17 : vector<1x128xf32> to vector<8x128xf32>
    %19 = arith.addf %16, %18 : vector<8x128xf32>
    %cst_11 = arith.constant dense<0xFF800000> : vector<8xf32>
    %20 = vector.multi_reduction <maximumf>, %19, %cst_11 [1] : vector<8x128xf32> to vector<8xf32>
    %21 = vector.shape_cast %20 : vector<8xf32> to vector<8x1xf32>
    %22 = vector.broadcast %21 : vector<8x1xf32> to vector<8x128xf32>
    %23 = arith.subf %19, %22 : vector<8x128xf32>
    %24 = math.exp %23 : vector<8x128xf32>
    %cst_12 = arith.constant dense<0.000000e+00> : vector<8xf32>
    %25 = vector.multi_reduction <add>, %24, %cst_12 [1] : vector<8x128xf32> to vector<8xf32>
    %26 = vector.shape_cast %25 : vector<8xf32> to vector<8x1xf32>
    %27 = tpu.reciprocal %26 : vector<8x1xf32> -> vector<8x1xf32>
    %28 = vector.broadcast %27 : vector<8x1xf32> to vector<8x128xf32>
    %29 = arith.mulf %24, %28 : vector<8x128xf32>
    %c0_13 = arith.constant 0 : index
    %c0_14 = arith.constant 0 : index
    %30 = vector.load %arg6[%c0_13, %c0_14] : memref<8x128xf32, #tpu.memory_space<vmem>>, vector<8x128xf32>
    tpu.vector_store %arg6[%c0_13, %c0_14], %29 {strides = array<i32>} : memref<8x128xf32, #tpu.memory_space<vmem>>, vector<8x128xf32>,
    return
  }
  func.func @transform_0(%arg0: i32) -> (i32, i32) {
    %c0_i32 = arith.constant 0 : i32
    %c0_i32_0 = arith.constant 0 : i32
    return %arg0, %c0_i32 : i32, i32
  }
  func.func @transform_1(%arg0: i32) -> (i32, i32) {
    %c0_i32 = arith.constant 0 : i32
    %c0_i32_0 = arith.constant 0 : i32
    %c0_i32_1 = arith.constant 0 : i32
    return %c0_i32, %c0_i32_0 : i32, i32
  }
  func.func @transform_2(%arg0: i32) -> (i32, i32) {
    %c0_i32 = arith.constant 0 : i32
    %c0_i32_0 = arith.constant 0 : i32
    %c0_i32_1 = arith.constant 0 : i32
    return %c0_i32, %c0_i32_0 : i32, i32
  }
  func.func @transform_3(%arg0: i32) -> (i32, i32) {
    %c0_i32 = arith.constant 0 : i32
    %c0_i32_0 = arith.constant 0 : i32
    %c0_i32_1 = arith.constant 0 : i32
    return %c0_i32, %c0_i32_0 : i32, i32
  }
  func.func @transform_4(%arg0: i32) -> (i32, i32) {
    %c0_i32 = arith.constant 0 : i32
    %c0_i32_0 = arith.constant 0 : i32
    %c0_i32_1 = arith.constant 0 : i32
    return %c0_i32, %c0_i32_0 : i32, i32
  }
  func.func @transform_5(%arg0: i32) -> (i32, i32) {
    %c0_i32 = arith.constant 0 : i32
    %c0_i32_0 = arith.constant 0 : i32
    return %arg0, %c0_i32 : i32, i32
  }
}

</mosaic_0001>

<llo_original>
// kernel: policy_network_forward.1
$region0: #{policy_network_forward.1}
  #allocation0 [shape = 'u32[]', space=smem, size = 0x4, offset = 0x4, fixed_abs, tag = 'smem constant byte address 0x4 - core index']
  #allocation1 [shape = 'u32[144,128]{1,0:T(1,128)}', space=vmem, size = 0x12000, scoped, tag = 'internal scratch']
  %s0 = inlined_call_operand.vmem [shape: s32[8,1], index: 0, kind: input, shape index: {}]
  %s1 = inlined_call_operand.vmem [shape: bf16[128,128], index: 1, kind: input, shape index: {}]
  %s2 = inlined_call_operand.vmem [shape: f32[1,128], index: 2, kind: input, shape index: {}]
  %s3 = inlined_call_operand.vmem [shape: bf16[128,128], index: 3, kind: input, shape index: {}]
  %s4 = inlined_call_operand.vmem [shape: f32[1,128], index: 4, kind: input, shape index: {}]
  %s5 = inlined_call_operand.vmem [shape: f32[8,128], index: 5, kind: output, shape index: {}]
  %s6 = sld [smem:[#allocation0]]
  $region30: #{policy_network_forward.1} parent=0
    _
  %s8 = ssub.s32 1, %s6
  %s9 = scalar_select 0, %s8, %s6
  // Predicated region
  $region2: #{policy_network_forward.1} parent=0 // pred_check
    _
  $region3: #{policy_network_forward.1} parent=0 // pred_check_branch
    %11 = sbr.rel (0) target = $region5
  $region4: #{policy_network_forward.1} parent=0 // pred_region
    _
  $region5: #{policy_network_forward.1} parent=0 // pred_fallthru
    _
  // Predicated region
  $region6: #{policy_network_forward.1} parent=0 // pred_check
    _
  $region7: #{policy_network_forward.1} parent=0 // pred_check_branch
    %13 = sbr.rel (0) target = $region9
  $region8: #{policy_network_forward.1} parent=0 // pred_region
    _
  $region9: #{policy_network_forward.1} parent=0 // pred_fallthru
    _
  // Predicated region
  $region10: #{policy_network_forward.1} parent=0 // pred_check
    _
  $region11: #{policy_network_forward.1} parent=0 // pred_check_branch
    %15 = sbr.rel (0) target = $region13
  $region12: #{policy_network_forward.1} parent=0 // pred_region
    _
  $region13: #{policy_network_forward.1} parent=0 // pred_fallthru
    _
  // Predicated region
  $region14: #{policy_network_forward.1} parent=0 // pred_check
    _
  $region15: #{policy_network_forward.1} parent=0 // pred_check_branch
    %17 = sbr.rel (0) target = $region17
  $region16: #{policy_network_forward.1} parent=0 // pred_region
    _
  $region17: #{policy_network_forward.1} parent=0 // pred_fallthru
    _
  // Predicated region
  $region18: #{policy_network_forward.1} parent=0 // pred_check
    _
  $region19: #{policy_network_forward.1} parent=0 // pred_check_branch
    %19 = sbr.rel (0) target = $region21
  $region20: #{policy_network_forward.1} parent=0 // pred_region
    _
  $region21: #{policy_network_forward.1} parent=0 // pred_fallthru
    _
  %v21 = vld [vmem:[%s0] sm:$0xff]
  %v22 = vlaneseq
  %v23 = vand.u32 %v22, 127
  %24 = vset.pattern.permute.xlu0 0
  %25 = vperm.xlu0 %24, %v21
  %v26 = vpop.permute.xlu0 %25
  %vm27 = vcmp.eq.s32.totalorder %v23, %v26
  %v28 = vsel %vm27, 1, 0
  %v29 = vcvt.s32.f32 %v28
  %v30 = vpack.c.bf16 %v29, %v29
  %v31 = vld [vmem:[%s1] sm:$0xf]
  %v32 = vld [vmem:[%s1 + $0x4] sm:$0xf]
  %v33 = vld [vmem:[%s1 + $0x8] sm:$0xf]
  %v34 = vld [vmem:[%s1 + $0xc] sm:$0xf]
  %v35 = vld [vmem:[%s1 + $0x10] sm:$0xf]
  %v36 = vld [vmem:[%s1 + $0x14] sm:$0xf]
  %v37 = vld [vmem:[%s1 + $0x18] sm:$0xf]
  %v38 = vld [vmem:[%s1 + $0x1c] sm:$0xf]
  %v39 = vld [vmem:[%s1 + $0x20] sm:$0xf]
  %v40 = vld [vmem:[%s1 + $0x24] sm:$0xf]
  %v41 = vld [vmem:[%s1 + $0x28] sm:$0xf]
  %v42 = vld [vmem:[%s1 + $0x2c] sm:$0xf]
  %v43 = vld [vmem:[%s1 + $0x30] sm:$0xf]
  %v44 = vld [vmem:[%s1 + $0x34] sm:$0xf]
  %v45 = vld [vmem:[%s1 + $0x38] sm:$0xf]
  %v46 = vld [vmem:[%s1 + $0x3c] sm:$0xf]
  %v47 = vld [vmem:[%s2] sm:$0x1]
  %v49 = vlaneseq
  %v50 = vshrl.u32 %v49, 7
  %v51 = vsub.s32 0, %v50
  %v52 = vrot.slane %v47, %v51
  %v70 = vunpack.c.l.b16 %v31
  %v71 = vunpack.c.l.b16 %v32
  %v72 = vunpack.c.l.b16 %v33
  %v73 = vunpack.c.l.b16 %v34
  %v74 = vunpack.c.l.b16 %v35
  %v75 = vunpack.c.l.b16 %v36
  %v76 = vunpack.c.l.b16 %v37
  %v77 = vunpack.c.l.b16 %v38
  %v78 = vunpack.c.l.b16 %v39
  %v79 = vunpack.c.l.b16 %v40
  %v80 = vunpack.c.l.b16 %v41
  %v81 = vunpack.c.l.b16 %v42
  %v82 = vunpack.c.l.b16 %v43
  %v83 = vunpack.c.l.b16 %v44
  %v84 = vunpack.c.l.b16 %v45
  %v85 = vunpack.c.l.b16 %v46
  %v86 = vpack.c.b16 %v71, %v70
  %v87 = vpack.c.b16 %v73, %v72
  %v88 = vpack.c.b16 %v75, %v74
  %v89 = vpack.c.b16 %v77, %v76
  %v90 = vpack.c.b16 %v79, %v78
  %v91 = vpack.c.b16 %v81, %v80
  %v92 = vpack.c.b16 %v83, %v82
  %v93 = vpack.c.b16 %v85, %v84
  %102 = vmatprep.subr.bf16.mxu0 0
  %103 = vmatpush1.bf16.msra.mxu0 %v86
  %104 = vmatprep.subr.bf16.mxu0 0
  %105 = vmatpush1.bf16.msra.mxu0 %v87
  %106 = vmatprep.subr.bf16.mxu0 0
  %107 = vmatpush1.bf16.msra.mxu0 %v88
  %108 = vmatprep.subr.bf16.mxu0 0
  %109 = vmatpush1.bf16.msra.mxu0 %v89
  %110 = vmatprep.subr.bf16.mxu0 0
  %111 = vmatpush1.bf16.msra.mxu0 %v90
  %112 = vmatprep.subr.bf16.mxu0 0
  %113 = vmatpush1.bf16.msra.mxu0 %v91
  %114 = vmatprep.subr.bf16.mxu0 0
  %115 = vmatpush1.bf16.msra.mxu0 %v92
  %116 = vmatprep.subr.bf16.mxu0 0
  %117 = vmatpush1.bf16.msra.mxu0 %v93
  %118 = vmatprep.subr.bf16.mxu0 0
  %119 = vmatpush1.bf16.msra.mxu0 0
  %120 = vmatprep.subr.bf16.mxu0 0
  %121 = vmatpush1.bf16.msra.mxu0 0
  %122 = vmatprep.subr.bf16.mxu0 0
  %123 = vmatpush1.bf16.msra.mxu0 0
  %124 = vmatprep.subr.bf16.mxu0 0
  %125 = vmatpush1.bf16.msra.mxu0 0
  %126 = vmatprep.subr.bf16.mxu0 0
  %127 = vmatpush1.bf16.msra.mxu0 0
  %128 = vmatprep.subr.bf16.mxu0 0
  %129 = vmatpush1.bf16.msra.mxu0 0
  %130 = vmatprep.subr.bf16.mxu0 0
  %131 = vmatpush1.bf16.msra.mxu0 0
  %132 = vmatprep.subr.bf16.mxu0 0
  %133 = vmatpush1.bf16.msra.mxu0 0
  %134 = vmatprep.mubr.bf16.mxu0 0
  %135 = vmatmul.mubr.bf16.gmra.mrb[0].mxu0 %v30
  %v136 = vpop.f32.mrb[0].mxu0
  %v137 = vadd.f32 %v52, %v136
  %v138 = vpop.f32.mrb[0].mxu0
  %v139 = vpop.f32.mrb[0].mxu0
  %v140 = vpop.f32.mrb[0].mxu0
  %141 = vdwg.mxu0
  %v142 = vmax.f32 %v137, 0.0
  %v143 = vpack.c.bf16 %v142, %v142
  %v144 = vld [vmem:[%s3] sm:$0xf]
  %v145 = vld [vmem:[%s3 + $0x4] sm:$0xf]
  %v146 = vld [vmem:[%s3 + $0x8] sm:$0xf]
  %v147 = vld [vmem:[%s3 + $0xc] sm:$0xf]
  %v148 = vld [vmem:[%s3 + $0x10] sm:$0xf]
  %v149 = vld [vmem:[%s3 + $0x14] sm:$0xf]
  %v150 = vld [vmem:[%s3 + $0x18] sm:$0xf]
  %v151 = vld [vmem:[%s3 + $0x1c] sm:$0xf]
  %v152 = vld [vmem:[%s3 + $0x20] sm:$0xf]
  %v153 = vld [vmem:[%s3 + $0x24] sm:$0xf]
  %v154 = vld [vmem:[%s3 + $0x28] sm:$0xf]
  %v155 = vld [vmem:[%s3 + $0x2c] sm:$0xf]
  %v156 = vld [vmem:[%s3 + $0x30] sm:$0xf]
  %v157 = vld [vmem:[%s3 + $0x34] sm:$0xf]
  %v158 = vld [vmem:[%s3 + $0x38] sm:$0xf]
  %v159 = vld [vmem:[%s3 + $0x3c] sm:$0xf]
  %v160 = vld [vmem:[%s4] sm:$0x1]
  %v162 = vlaneseq
  %v163 = vshrl.u32 %v162, 7
  %v164 = vsub.s32 0, %v163
  %v165 = vrot.slane %v160, %v164
  %v183 = vunpack.c.l.b16 %v144
  %v184 = vunpack.c.l.b16 %v145
  %v185 = vunpack.c.l.b16 %v146
  %v186 = vunpack.c.l.b16 %v147
  %v187 = vunpack.c.l.b16 %v148
  %v188 = vunpack.c.l.b16 %v149
  %v189 = vunpack.c.l.b16 %v150
  %v190 = vunpack.c.l.b16 %v151
  %v191 = vunpack.c.l.b16 %v152
  %v192 = vunpack.c.l.b16 %v153
  %v193 = vunpack.c.l.b16 %v154
  %v194 = vunpack.c.l.b16 %v155
  %v195 = vunpack.c.l.b16 %v156
  %v196 = vunpack.c.l.b16 %v157
  %v197 = vunpack.c.l.b16 %v158
  %v198 = vunpack.c.l.b16 %v159
  %v199 = vpack.c.b16 %v184, %v183
  %v200 = vpack.c.b16 %v186, %v185
  %v201 = vpack.c.b16 %v188, %v187
  %v202 = vpack.c.b16 %v190, %v189
  %v203 = vpack.c.b16 %v192, %v191
  %v204 = vpack.c.b16 %v194, %v193
  %v205 = vpack.c.b16 %v196, %v195
  %v206 = vpack.c.b16 %v198, %v197
  %215 = vmatprep.subr.bf16.mxu0 0
  %216 = vmatpush1.bf16.msra.mxu0 %v199
  %217 = vmatprep.subr.bf16.mxu0 0
  %218 = vmatpush1.bf16.msra.mxu0 %v200
  %219 = vmatprep.subr.bf16.mxu0 0
  %220 = vmatpush1.bf16.msra.mxu0 %v201
  %221 = vmatprep.subr.bf16.mxu0 0
  %222 = vmatpush1.bf16.msra.mxu0 %v202
  %223 = vmatprep.subr.bf16.mxu0 0
  %224 = vmatpush1.bf16.msra.mxu0 %v203
  %225 = vmatprep.subr.bf16.mxu0 0
  %226 = vmatpush1.bf16.msra.mxu0 %v204
  %227 = vmatprep.subr.bf16.mxu0 0
  %228 = vmatpush1.bf16.msra.mxu0 %v205
  %229 = vmatprep.subr.bf16.mxu0 0
  %230 = vmatpush1.bf16.msra.mxu0 %v206
  %231 = vmatprep.subr.bf16.mxu0 0
  %232 = vmatpush1.bf16.msra.mxu0 0
  %233 = vmatprep.subr.bf16.mxu0 0
  %234 = vmatpush1.bf16.msra.mxu0 0
  %235 = vmatprep.subr.bf16.mxu0 0
  %236 = vmatpush1.bf16.msra.mxu0 0
  %237 = vmatprep.subr.bf16.mxu0 0
  %238 = vmatpush1.bf16.msra.mxu0 0
  %239 = vmatprep.subr.bf16.mxu0 0
  %240 = vmatpush1.bf16.msra.mxu0 0
  %241 = vmatprep.subr.bf16.mxu0 0
  %242 = vmatpush1.bf16.msra.mxu0 0
  %243 = vmatprep.subr.bf16.mxu0 0
  %244 = vmatpush1.bf16.msra.mxu0 0
  %245 = vmatprep.subr.bf16.mxu0 0
  %246 = vmatpush1.bf16.msra.mxu0 0
  %247 = vmatprep.mubr.bf16.mxu0 0
  %248 = vmatmul.mubr.bf16.gmra.mrb[0].mxu0 %v143
  %v249 = vpop.f32.mrb[0].mxu0
  %v250 = vadd.f32 %v165, %v249
  %v251 = vpop.f32.mrb[0].mxu0
  %v252 = vpop.f32.mrb[0].mxu0
  %v253 = vpop.f32.mrb[0].mxu0
  %254 = vdwg.mxu0
  %255 = vmax.xlane.f32.xlu0 %v250
  %v256 = vpop.xlane.xlu0 %255
  %v257 = vsub.f32 %v250, %v256
  %v258 = vmul.f32 %v257, 1.442695
  %v259 = vpow.pop %v258
  %260 = vadd.xlane.f32.xlu0 %v259
  %v261 = vpop.xlane.xlu0 %260
  %v262 = vrcp.pop %v261
  %v263 = vmul.f32 %v259, %v262
  %264 = vst [vmem:[%s5] sm:$0xff] %v263
  // Predicated region
  $region22: #{policy_network_forward.1} parent=0 // pred_check
    _
  $region23: #{policy_network_forward.1} parent=0 // pred_check_branch
    %266 = sbr.rel (0) target = $region25
  $region24: #{policy_network_forward.1} parent=0 // pred_region
    _
  $region25: #{policy_network_forward.1} parent=0 // pred_fallthru
    _
  // Predicated region
  $region26: #{policy_network_forward.1} parent=0 // pred_check
    _
  $region27: #{policy_network_forward.1} parent=0 // pred_check_branch
    %268 = sbr.rel (0) target = $region29
  $region28: #{policy_network_forward.1} parent=0 // pred_region
    _
  $region29: #{policy_network_forward.1} parent=0 // pred_fallthru
    _

</llo_original>
